<compile_context>
chip_gen: v5e
topology: v5e:2x2
jax: 0.10.0
libtpu: 0.0.40
codegen_flags: <defaults>
</compile_context>

<pallas_src>
import functools

import jax
import jax.numpy as jnp
import numpy as np
from jax.experimental import pallas as pl
from jax.experimental.pallas import tpu as pltpu

_NEG_SLOPE = 0.01   # nn.LeakyReLU default negative_slope
_PAD = 8            # zero-halo rows on each side of scratch buffers (aligned)


def _lrelu(v):
    return jnp.where(v > 0, v, _NEG_SLOPE * v)


# -----------------------------------------------------------------------------
# Kernel: two fused Inception blocks, NLC layout, one batch tile per grid step.
# -----------------------------------------------------------------------------
def _essay_conv_kernel(xp_ref,
                       w1a_ref, b1a_ref, w23a_ref, b23a_ref,
                       w1b_ref, b1b_ref, w23b_ref, b23b_ref,
                       out_ref,
                       mid_ref, h23a_ref, h23b_ref,
                       *, L, Lc, cos1, cos2):
    """Refs per grid step (P = _PAD, Lb = Lc + 2P):
       xp_ref   : (TN, Lb, cin)    input in padded coords: rows [P, P+L) hold
                                   data, everything else is zero.
       w1*_ref  : (3*cin_b, 4*cos) fused stage-1 weight [b1|b2a|b3a|b4]
                                   (1x1 convs at the center tap).
       b1*_ref  : (1, 1, 4*cos)    fused stage-1 bias (f32).
       w23*_ref : (5*2cos, 2cos)   block-diagonal fused stage-2 weight over the
                                   lane-concatenated [h2|h3] activation.
       b23*_ref : (1, 1, 2cos)     fused stage-2 bias (f32).
       out_ref  : (TN, Lc, 4*cos2) rows [0, L) valid; tail trimmed by wrapper.
       mid_ref / h23*_ref          VMEM scratch in padded coords (compute dtype).
    """
    P = _PAD
    tn, Lb, _ = xp_ref.shape

    # Valid-row mask in output coordinates (rows >= L emulate zero padding).
    rows = jax.lax.broadcasted_iota(jnp.int32, (Lc, 1), 0)
    valid = (rows < L)[None]                       # (1, Lc, 1)

    def conv(src_ref, k, p, w, b):
        """'same' conv (kernel k, pad p) of a padded-coords ref -> f32 value of
        shape (tn, Lc, Cout) in output coordinates (rows [0, L) valid)."""
        c = src_ref.shape[-1]
        if c >= 128:
            # Wide channels: per-tap accumulating matmuls (no lane-concat copies).
            y = None
            for j in range(k):
                xj = src_ref[:, P - p + j:P - p + j + Lc, :]
                yj = jnp.dot(xj.reshape(tn * Lc, c), w[j * c:(j + 1) * c, :],
                             preferred_element_type=jnp.float32)
                y = yj if y is None else y + yj
        else:
            # Narrow channels: lane-concat the k taps so K = k*c feeds one
            # bigger MXU matmul (flatten is layout-preserving: Lc % 8 == 0).
            xk = jnp.concatenate(
                [src_ref[:, P - p + j:P - p + j + Lc, :] for j in range(k)],
                axis=-1)
            y = jnp.dot(xk.reshape(tn * Lc, k * c), w,
                        preferred_element_type=jnp.float32)
        return y.reshape(tn, Lc, -1) + b

    def store_padded(dst_ref, val):
        """Masked store of an output-coords value into a padded-coords scratch
        ref; halo rows re-zeroed every step (megacore safe)."""
        c = dst_ref.shape[-1]
        dst_ref[:, :P, :] = jnp.zeros((tn, P, c), dst_ref.dtype)
        dst_ref[:, P + Lc:Lb, :] = jnp.zeros((tn, Lb - P - Lc, c), dst_ref.dtype)
        dst_ref[:, P:P + Lc, :] = jnp.where(valid, val, 0.0).astype(dst_ref.dtype)

    def inception(src_ref, w1, b1, w23, b23, h23_ref, cos):
        # Stage 1: branch1 / branch2a / branch3a / branch4 as ONE matmul.
        # TODO(synk): at production embedding widths, split the two 1x1
        # branches out of the 3-tap fused matmul to recover ~1/3 stage-1 MACs.
        u = conv(src_ref, 3, 1, w1, b1)              # (tn, Lc, 4*cos) f32
        # Stage 2: branch2b (k=3) + branch3b (k=5) as ONE block-diagonal
        # matmul over the lane-concatenated [h2 | h3] activation.
        store_padded(h23_ref, _lrelu(u[..., cos:3 * cos]))
        y23 = conv(h23_ref, 5, 2, w23, b23)          # (tn, Lc, 2*cos) f32
        return _lrelu(jnp.concatenate(
            [u[..., :cos], y23, u[..., 3 * cos:]], axis=-1))

    y_l1 = inception(xp_ref, w1a_ref[...], b1a_ref[...],
                     w23a_ref[...], b23a_ref[...], h23a_ref, cos1)
    store_padded(mid_ref, y_l1)                      # layer-1 -> layer-2, VMEM only
    y_l2 = inception(mid_ref, w1b_ref[...], b1b_ref[...],
                     w23b_ref[...], b23b_ref[...], h23b_ref, cos2)
    out_ref[...] = y_l2.astype(out_ref.dtype)


# -----------------------------------------------------------------------------
# Tiling heuristic + wrappers
# -----------------------------------------------------------------------------
def _pick_tile_n(N, Lc, Lb, cin, cos1, cos2, cdt, out_dtype,
                 min_rows=512, tile_budget=16 << 20):
    co1, co2 = 4 * cos1, 4 * cos2
    cb = jnp.dtype(cdt).itemsize
    ob = jnp.dtype(out_dtype).itemsize
    # Rough per-batch-row VMEM footprint: double-buffered in/out blocks,
    # padded-coords scratches, and the larger live f32 intermediates.
    per_row = (2 * Lb * cin * cb + 2 * Lc * co2 * ob
               + Lb * (co1 + 2 * cos1 + 2 * cos2) * cb
               + Lc * (3 * cin * cb + 20 * max(cos1, cos2) * cb
                       + 8 * (co1 + co2)))
    t = max(1, -(-min_rows // Lc))          # feed the MXU with >= ~512 rows
    t = min(t, max(1, N // 2))              # keep the grid >= 2 steps (megacore)
    t = max(1, min(t, tile_budget // max(per_row, 1)))
    return t


def essaynet_conv_nlc(x_nlc, kp1, kp2, *, tile_n=None, out_dtype=jnp.float32):
    """EssayNet.conv on NLC input: (N, L, cin) -> (N, L, 4*cos2)."""
    N, L, cin = x_nlc.shape
    cos1 = kp1["b23p"].shape[-1] // 2
    cos2 = kp2["b23p"].shape[-1] // 2
    co1, co2 = 4 * cos1, 4 * cos2
    assert kp1["w1p"].shape[0] == 3 * cin
    assert kp2["w1p"].shape[0] == 3 * co1
    cdt = kp1["w1p"].dtype                   # matmul compute dtype (f32 / bf16)
    P = _PAD

    Lc = ((max(L, 1) + 7) // 8) * 8          # compute rows, sublane aligned
    Lb = Lc + 2 * P                          # + zero halo on each side

    if tile_n is None:
        tile_n = _pick_tile_n(N, Lc, Lb, cin, cos1, cos2, cdt, out_dtype)
    tile_n = max(1, min(int(tile_n), N))
    Np = ((N + tile_n - 1) // tile_n) * tile_n

    # Single pad: halo + tail alignment + batch round-up, all at once.
    xp = jnp.pad(x_nlc.astype(cdt), ((0, Np - N), (P, Lb - P - L), (0, 0)))

    flops = 2 * Np * Lc * (3 * cin * co1 + 5 * (2 * cos1) ** 2
                           + 3 * co1 * co2 + 5 * (2 * cos2) ** 2)
    bytes_accessed = (int(xp.size) * xp.dtype.itemsize
                      + Np * Lc * co2 * jnp.dtype(out_dtype).itemsize
                      + sum(int(v.size) * v.dtype.itemsize
                            for kp in (kp1, kp2) for v in kp.values()))

    kernel = functools.partial(_essay_conv_kernel, L=L, Lc=Lc,
                               cos1=cos1, cos2=cos2)
    out = pl.pallas_call(
        kernel,
        out_shape=jax.ShapeDtypeStruct((Np, Lc, co2), out_dtype),
        grid=(Np // tile_n,),
        in_specs=[
            pl.BlockSpec((tile_n, Lb, cin), lambda n: (n, 0, 0)),
            pl.BlockSpec((3 * cin, co1), lambda n: (0, 0)),
            pl.BlockSpec((1, 1, co1), lambda n: (0, 0, 0)),
            pl.BlockSpec((10 * cos1, 2 * cos1), lambda n: (0, 0)),
            pl.BlockSpec((1, 1, 2 * cos1), lambda n: (0, 0, 0)),
            pl.BlockSpec((3 * co1, co2), lambda n: (0, 0)),
            pl.BlockSpec((1, 1, co2), lambda n: (0, 0, 0)),
            pl.BlockSpec((10 * cos2, 2 * cos2), lambda n: (0, 0)),
            pl.BlockSpec((1, 1, 2 * cos2), lambda n: (0, 0, 0)),
        ],
        out_specs=pl.BlockSpec((tile_n, Lc, co2), lambda n: (n, 0, 0)),
        scratch_shapes=[
            pltpu.VMEM((tile_n, Lb, co1), cdt),        # layer-1 output
            pltpu.VMEM((tile_n, Lb, 2 * cos1), cdt),   # layer-1 [h2|h3]
            pltpu.VMEM((tile_n, Lb, 2 * cos2), cdt),   # layer-2 [h2|h3]
        ],
        compiler_params=pltpu.CompilerParams(
            dimension_semantics=("parallel",),
            vmem_limit_bytes=32 * 1024 * 1024),
        cost_estimate=pl.CostEstimate(flops=flops, transcendentals=0,
                                      bytes_accessed=bytes_accessed),
    )(xp, kp1["w1p"], kp1["b1p"], kp1["w23p"], kp1["b23p"],
      kp2["w1p"], kp2["b1p"], kp2["w23p"], kp2["b23p"])
    # TODO(synk): if the real model has 4*cos < 128 lanes, consider packing
    # several batch rows' channels into one 128-lane output slab (dense vst).
    return out[:N, :L, :]


def essaynet_conv(x_ncl, kp1, kp2, **kw):
    """Torch-interface EssayNet.conv: (N, cin, L) -> (N, 4*cos2, L)."""
    y = essaynet_conv_nlc(jnp.transpose(x_ncl, (0, 2, 1)), kp1, kp2, **kw)
    return jnp.transpose(y, (0, 2, 1))


# -----------------------------------------------------------------------------
# Deterministic parameters (mirrors Inception.__init__ / init_cnn) + packing.
# -----------------------------------------------------------------------------
def make_torch_params(key, cin, co):
    assert co % 4 == 0
    cos = co // 4

    def xavier(k, o, i, ksz):
        std = (2.0 / (i * ksz + o * ksz)) ** 0.5
        return std * jax.random.normal(k, (o, i, ksz), jnp.float32)

    def bias(k, o):
        return jax.random.uniform(k, (o,), jnp.float32, -0.1, 0.1)

    ks = jax.random.split(key, 10)
    return {
        "w1":  xavier(ks[0], cos, cin, 1), "b1":  bias(ks[1], cos),
        "w2a": xavier(ks[2], cos, cin, 1), "b2a": jnp.zeros((cos,), jnp.float32),
        "w2b": xavier(ks[3], cos, cos, 3), "b2b": bias(ks[4], cos),
        "w3a": xavier(ks[5], cos, cin, 3), "b3a": jnp.zeros((cos,), jnp.float32),
        "w3b": xavier(ks[6], cos, cos, 5), "b3b": bias(ks[7], cos),
        "w4":  xavier(ks[8], cos, cin, 3), "b4":  bias(ks[9], cos),
    }


def pack_params(p, compute_dtype=jnp.float32):
    """Torch (O, I, K) conv weights -> fused kernel weights.

    Stage-1 columns are [branch1 | branch2a | branch3a | branch4]; 1x1 convs sit
    at the center tap of the 3-tap window.  Stage-2 is a block-diagonal k=5
    weight over [h2|h3] lanes (branch2's k=3 weight at the 3 center taps).
    """
    cos = p["b1"].shape[0]
    cin = p["w1"].shape[1]

    def kio(w):                      # (O, I, K) -> (K, I, O)
        return jnp.transpose(w, (2, 1, 0))

    def center1(w):                  # (O, I, 1) -> (3, I, O), data at tap 1
        z = jnp.zeros((3, cin, cos), jnp.float32)
        return z.at[1].set(jnp.transpose(w[:, :, 0], (1, 0)))

    w1 = jnp.concatenate([center1(p["w1"]), center1(p["w2a"]),
                          kio(p["w3a"]), kio(p["w4"])], axis=-1)   # (3, cin, 4cos)
    b1 = jnp.concatenate([p["b1"], p["b2a"], p["b3a"], p["b4"]])

    w23 = jnp.zeros((5, 2 * cos, 2 * cos), jnp.float32)
    w23 = w23.at[1:4, :cos, :cos].set(kio(p["w2b"]))   # branch2: taps 1..3
    w23 = w23.at[:, cos:, cos:].set(kio(p["w3b"]))     # branch3: all 5 taps
    b23 = jnp.concatenate([p["b2b"], p["b3b"]])

    return {
        "w1p":  w1.reshape(3 * cin, 4 * cos).astype(compute_dtype),
        "b1p":  b1.reshape(1, 1, 4 * cos).astype(jnp.float32),
        "w23p": w23.reshape(10 * cos, 2 * cos).astype(compute_dtype),
        "b23p": b23.reshape(1, 1, 2 * cos).astype(jnp.float32),
    }


# -----------------------------------------------------------------------------
# Pure-JAX reference (same semantics as the torch forward) for validation.
# -----------------------------------------------------------------------------
def reference_forward(x, p):
    def conv(x, w, b, pad):
        y = jax.lax.conv_general_dilated(
            x, w, window_strides=(1,), padding=[(pad, pad)],
            dimension_numbers=("NCH", "OIH", "NCH"))
        return y + b[None, :, None]

    b1 = conv(x, p["w1"], p["b1"], 0)
    b2 = conv(_lrelu(conv(x, p["w2a"], p["b2a"], 0)), p["w2b"], p["b2b"], 1)
    b3 = conv(_lrelu(conv(x, p["w3a"], p["b3a"], 1)), p["w3b"], p["b3b"], 2)
    b4 = conv(x, p["w4"], p["b4"], 1)
    return _lrelu(jnp.concatenate([b1, b2, b3, b4], axis=1))


if __name__ == "__main__":
    def check(key, N, CIN, L, CO):
        kx, k1, k2 = jax.random.split(key, 3)
        x = jax.random.normal(kx, (N, CIN, L), jnp.float32)
        tp1 = make_torch_params(k1, CIN, CO)   # Inception(embedding_size, inception_size)
        tp2 = make_torch_params(k2, CO, CO)    # Inception(inception_size, inception_size)
        ref = jax.block_until_ready(
            reference_forward(reference_forward(x, tp1), tp2))

        # f32 operand path (strict).
        out = jax.block_until_ready(
            essaynet_conv(x, pack_params(tp1), pack_params(tp2)))
        assert out.shape == (N, CO, L), out.shape
        np.testing.assert_allclose(np.asarray(out), np.asarray(ref),
                                   atol=1e-4, rtol=1e-4)

        # bf16 operand path (f32 accumulation / elementwise), all chips.
        out_h = jax.block_until_ready(
            essaynet_conv(x, pack_params(tp1, jnp.bfloat16),
                          pack_params(tp2, jnp.bfloat16)))
        np.testing.assert_allclose(np.asarray(out_h), np.asarray(ref),
                                   atol=1e-1, rtol=1e-1)

    key = jax.random.PRNGKey(0)
    ka, kb = jax.random.split(key)
    # batch of sentences=2, embedding_size=4, seq-len=16, inception_size=16
    check(ka, 2, 4, 16, 16)
    # odd length (masking), batch padding and tile_n > 1 path
    check(kb, 5, 4, 11, 16)
    print("KERNEL_OK")
</pallas_src>

<mosaic_0001>
module attributes {stable_mosaic.version = 11 : i64} {
  func.func @_essay_conv_kernel(%arg0: i32, %arg1: memref<1x32x4xf32, #tpu.memory_space<vmem>>, %arg2: memref<12x16xf32, #tpu.memory_space<vmem>>, %arg3: memref<1x1x16xf32, #tpu.memory_space<vmem>>, %arg4: memref<40x8xf32, #tpu.memory_space<vmem>>, %arg5: memref<1x1x8xf32, #tpu.memory_space<vmem>>, %arg6: memref<48x16xf32, #tpu.memory_space<vmem>>, %arg7: memref<1x1x16xf32, #tpu.memory_space<vmem>>, %arg8: memref<40x8xf32, #tpu.memory_space<vmem>>, %arg9: memref<1x1x8xf32, #tpu.memory_space<vmem>>, %arg10: memref<1x16x16xf32, #tpu.memory_space<vmem>>, %arg11: memref<1x32x16xf32, #tpu.memory_space<vmem>>, %arg12: memref<1x32x8xf32, #tpu.memory_space<vmem>>, %arg13: memref<1x32x8xf32, #tpu.memory_space<vmem>>) attributes {dimension_semantics = [#tpu.dimension_semantics<parallel>], iteration_bounds = array<i64: 2>, scalar_prefetch = 0 : i64, scratch_operands = 3 : i64, tpu.core_type = #tpu.core_type<tc>, window_params = [{transform_indices = @transform_0, window_bounds = array<i64: 1, 32, 4>}, {pipeline_mode = #tpu.pipeline_mode<synchronous>, transform_indices = @transform_1, window_bounds = array<i64: 12, 16>}, {pipeline_mode = #tpu.pipeline_mode<synchronous>, transform_indices = @transform_2, window_bounds = array<i64: 1, 1, 16>}, {pipeline_mode = #tpu.pipeline_mode<synchronous>, transform_indices = @transform_3, window_bounds = array<i64: 40, 8>}, {pipeline_mode = #tpu.pipeline_mode<synchronous>, transform_indices = @transform_4, window_bounds = array<i64: 1, 1, 8>}, {pipeline_mode = #tpu.pipeline_mode<synchronous>, transform_indices = @transform_5, window_bounds = array<i64: 48, 16>}, {pipeline_mode = #tpu.pipeline_mode<synchronous>, transform_indices = @transform_6, window_bounds = array<i64: 1, 1, 16>}, {pipeline_mode = #tpu.pipeline_mode<synchronous>, transform_indices = @transform_7, window_bounds = array<i64: 40, 8>}, {pipeline_mode = #tpu.pipeline_mode<synchronous>, transform_indices = @transform_8, window_bounds = array<i64: 1, 1, 8>}, {transform_indices = @transform_9, window_bounds = array<i64: 1, 16, 16>}]} {
    %0 = tpu.iota {dimensions = array<i32: 0>} : vector<16x1xi32>
    %c16_i32 = arith.constant 16 : i32
    %1 = vector.broadcast %c16_i32 : i32 to vector<16x1xi32>
    %2 = arith.cmpi slt, %0, %1 : vector<16x1xi32>
    %3 = vector.shape_cast %2 : vector<16x1xi1> to vector<1x16x1xi1>
    %c0 = arith.constant 0 : index
    %c0_0 = arith.constant 0 : index
    %4 = vector.load %arg2[%c0, %c0_0] : memref<12x16xf32, #tpu.memory_space<vmem>>, vector<12x16xf32>
    %c0_1 = arith.constant 0 : index
    %c0_2 = arith.constant 0 : index
    %c0_3 = arith.constant 0 : index
    %5 = vector.load %arg3[%c0_1, %c0_2, %c0_3] : memref<1x1x16xf32, #tpu.memory_space<vmem>>, vector<1x1x16xf32>
    %c0_4 = arith.constant 0 : index
    %c0_5 = arith.constant 0 : index
    %6 = vector.load %arg4[%c0_4, %c0_5] : memref<40x8xf32, #tpu.memory_space<vmem>>, vector<40x8xf32>
    %c0_6 = arith.constant 0 : index
    %c0_7 = arith.constant 0 : index
    %c0_8 = arith.constant 0 : index
    %7 = vector.load %arg5[%c0_6, %c0_7, %c0_8] : memref<1x1x8xf32, #tpu.memory_space<vmem>>, vector<1x1x8xf32>
    %c0_9 = arith.constant 0 : index
    %c7 = arith.constant 7 : index
    %c0_10 = arith.constant 0 : index
    %8 = vector.load %arg1[%c0_9, %c7, %c0_10] : memref<1x32x4xf32, #tpu.memory_space<vmem>>, vector<1x16x4xf32>
    %c0_11 = arith.constant 0 : index
    %c8 = arith.constant 8 : index
    %c0_12 = arith.constant 0 : index
    %9 = vector.load %arg1[%c0_11, %c8, %c0_12] : memref<1x32x4xf32, #tpu.memory_space<vmem>>, vector<1x16x4xf32>
    %c0_13 = arith.constant 0 : index
    %c9 = arith.constant 9 : index
    %c0_14 = arith.constant 0 : index
    %10 = vector.load %arg1[%c0_13, %c9, %c0_14] : memref<1x32x4xf32, #tpu.memory_space<vmem>>, vector<1x16x4xf32>
    %11 = tpu.concatenate %8, %9, %10 in 2 : vector<1x16x4xf32>, vector<1x16x4xf32>, vector<1x16x4xf32> -> vector<1x16x12xf32>
    %12 = vector.shape_cast %11 : vector<1x16x12xf32> to vector<16x12xf32>
    %cst = arith.constant dense<0.000000e+00> : vector<16x16xf32>
    %13 = tpu.matmul %12, %4, %cst {dimension_numbers = #tpu.dot_dimension_numbers<[1], [0], [0], [1], [0, 0, 1, 1], [], []>} : vector<16x12xf32>, vector<12x16xf32>, vector<16x16xf32> -> vector<16x16xf32>
    %14 = vector.shape_cast %13 : vector<16x16xf32> to vector<1x16x16xf32>
    %15 = vector.broadcast %5 : vector<1x1x16xf32> to vector<1x16x16xf32>
    %16 = arith.addf %14, %15 : vector<1x16x16xf32>
    %17 = vector.extract_strided_slice %16 {offsets = [0, 0, 4], sizes = [1, 16, 8], strides = [1, 1, 1]} : vector<1x16x16xf32> to vector<1x16x8xf32>
    %cst_15 = arith.constant 0.000000e+00 : f32
    %18 = vector.broadcast %cst_15 : f32 to vector<1x16x8xf32>
    %19 = arith.cmpf ogt, %17, %18 : vector<1x16x8xf32>
    %cst_16 = arith.constant 0.00999999977 : f32
    %20 = vector.broadcast %cst_16 : f32 to vector<1x16x8xf32>
    %21 = arith.mulf %20, %17 : vector<1x16x8xf32>
    %22 = arith.select %19, %17, %21 : vector<1x16x8xi1>, vector<1x16x8xf32>
    %cst_17 = arith.constant 0.000000e+00 : f32
    %23 = vector.broadcast %cst_17 : f32 to vector<1x8x8xf32>
    %c0_18 = arith.constant 0 : index
    %c0_19 = arith.constant 0 : index
    %c0_20 = arith.constant 0 : index
    %24 = vector.load %arg12[%c0_18, %c0_19, %c0_20] : memref<1x32x8xf32, #tpu.memory_space<vmem>>, vector<1x8x8xf32>
    tpu.vector_store %arg12[%c0_18, %c0_19, %c0_20], %23 {strides = array<i32>} : memref<1x32x8xf32, #tpu.memory_space<vmem>>, vector<1x8x8xf32>,
    %cst_21 = arith.constant 0.000000e+00 : f32
    %25 = vector.broadcast %cst_21 : f32 to vector<1x8x8xf32>
    %c0_22 = arith.constant 0 : index
    %c24 = arith.constant 24 : index
    %c0_23 = arith.constant 0 : index
    %26 = vector.load %arg12[%c0_22, %c24, %c0_23] : memref<1x32x8xf32, #tpu.memory_space<vmem>>, vector<1x8x8xf32>
    tpu.vector_store %arg12[%c0_22, %c24, %c0_23], %25 {strides = array<i32>} : memref<1x32x8xf32, #tpu.memory_space<vmem>>, vector<1x8x8xf32>,
    %cst_24 = arith.constant 0.000000e+00 : f32
    %27 = vector.shape_cast %3 : vector<1x16x1xi1> to vector<1x16x1xi1>
    %28 = vector.broadcast %27 : vector<1x16x1xi1> to vector<1x16x8xi1>
    %29 = vector.broadcast %cst_24 : f32 to vector<1x16x8xf32>
    %30 = arith.select %28, %22, %29 : vector<1x16x8xi1>, vector<1x16x8xf32>
    %c0_25 = arith.constant 0 : index
    %c8_26 = arith.constant 8 : index
    %c0_27 = arith.constant 0 : index
    %31 = vector.load %arg12[%c0_25, %c8_26, %c0_27] : memref<1x32x8xf32, #tpu.memory_space<vmem>>, vector<1x16x8xf32>
    tpu.vector_store %arg12[%c0_25, %c8_26, %c0_27], %30 {strides = array<i32>} : memref<1x32x8xf32, #tpu.memory_space<vmem>>, vector<1x16x8xf32>,
    %c0_28 = arith.constant 0 : index
    %c6 = arith.constant 6 : index
    %c0_29 = arith.constant 0 : index
    %32 = vector.load %arg12[%c0_28, %c6, %c0_29] : memref<1x32x8xf32, #tpu.memory_space<vmem>>, vector<1x16x8xf32>
    %c0_30 = arith.constant 0 : index
    %c7_31 = arith.constant 7 : index
    %c0_32 = arith.constant 0 : index
    %33 = vector.load %arg12[%c0_30, %c7_31, %c0_32] : memref<1x32x8xf32, #tpu.memory_space<vmem>>, vector<1x16x8xf32>
    %c0_33 = arith.constant 0 : index
    %c8_34 = arith.constant 8 : index
    %c0_35 = arith.constant 0 : index
    %34 = vector.load %arg12[%c0_33, %c8_34, %c0_35] : memref<1x32x8xf32, #tpu.memory_space<vmem>>, vector<1x16x8xf32>
    %c0_36 = arith.constant 0 : index
    %c9_37 = arith.constant 9 : index
    %c0_38 = arith.constant 0 : index
    %35 = vector.load %arg12[%c0_36, %c9_37, %c0_38] : memref<1x32x8xf32, #tpu.memory_space<vmem>>, vector<1x16x8xf32>
    %c0_39 = arith.constant 0 : index
    %c10 = arith.constant 10 : index
    %c0_40 = arith.constant 0 : index
    %36 = vector.load %arg12[%c0_39, %c10, %c0_40] : memref<1x32x8xf32, #tpu.memory_space<vmem>>, vector<1x16x8xf32>
    %37 = tpu.concatenate %32, %33, %34, %35, %36 in 2 : vector<1x16x8xf32>, vector<1x16x8xf32>, vector<1x16x8xf32>, vector<1x16x8xf32>, vector<1x16x8xf32> -> vector<1x16x40xf32>
    %38 = vector.shape_cast %37 : vector<1x16x40xf32> to vector<16x40xf32>
    %cst_41 = arith.constant dense<0.000000e+00> : vector<16x8xf32>
    %39 = tpu.matmul %38, %6, %cst_41 {dimension_numbers = #tpu.dot_dimension_numbers<[1], [0], [0], [1], [0, 0, 1, 1], [], []>} : vector<16x40xf32>, vector<40x8xf32>, vector<16x8xf32> -> vector<16x8xf32>
    %40 = vector.shape_cast %39 : vector<16x8xf32> to vector<1x16x8xf32>
    %41 = vector.broadcast %7 : vector<1x1x8xf32> to vector<1x16x8xf32>
    %42 = arith.addf %40, %41 : vector<1x16x8xf32>
    %43 = vector.extract_strided_slice %16 {offsets = [0, 0, 0], sizes = [1, 16, 4], strides = [1, 1, 1]} : vector<1x16x16xf32> to vector<1x16x4xf32>
    %44 = vector.extract_strided_slice %16 {offsets = [0, 0, 12], sizes = [1, 16, 4], strides = [1, 1, 1]} : vector<1x16x16xf32> to vector<1x16x4xf32>
    %45 = tpu.concatenate %43, %42, %44 in 2 : vector<1x16x4xf32>, vector<1x16x8xf32>, vector<1x16x4xf32> -> vector<1x16x16xf32>
    %cst_42 = arith.constant 0.000000e+00 : f32
    %46 = vector.broadcast %cst_42 : f32 to vector<1x16x16xf32>
    %47 = arith.cmpf ogt, %45, %46 : vector<1x16x16xf32>
    %cst_43 = arith.constant 0.00999999977 : f32
    %48 = vector.broadcast %cst_43 : f32 to vector<1x16x16xf32>
    %49 = arith.mulf %48, %45 : vector<1x16x16xf32>
    %50 = arith.select %47, %45, %49 : vector<1x16x16xi1>, vector<1x16x16xf32>
    %cst_44 = arith.constant 0.000000e+00 : f32
    %51 = vector.broadcast %cst_44 : f32 to vector<1x8x16xf32>
    %c0_45 = arith.constant 0 : index
    %c0_46 = arith.constant 0 : index
    %c0_47 = arith.constant 0 : index
    %52 = vector.load %arg11[%c0_45, %c0_46, %c0_47] : memref<1x32x16xf32, #tpu.memory_space<vmem>>, vector<1x8x16xf32>
    tpu.vector_store %arg11[%c0_45, %c0_46, %c0_47], %51 {strides = array<i32>} : memref<1x32x16xf32, #tpu.memory_space<vmem>>, vector<1x8x16xf32>,
    %cst_48 = arith.constant 0.000000e+00 : f32
    %53 = vector.broadcast %cst_48 : f32 to vector<1x8x16xf32>
    %c0_49 = arith.constant 0 : index
    %c24_50 = arith.constant 24 : index
    %c0_51 = arith.constant 0 : index
    %54 = vector.load %arg11[%c0_49, %c24_50, %c0_51] : memref<1x32x16xf32, #tpu.memory_space<vmem>>, vector<1x8x16xf32>
    tpu.vector_store %arg11[%c0_49, %c24_50, %c0_51], %53 {strides = array<i32>} : memref<1x32x16xf32, #tpu.memory_space<vmem>>, vector<1x8x16xf32>,
    %cst_52 = arith.constant 0.000000e+00 : f32
    %55 = vector.shape_cast %3 : vector<1x16x1xi1> to vector<1x16x1xi1>
    %56 = vector.broadcast %55 : vector<1x16x1xi1> to vector<1x16x16xi1>
    %57 = vector.broadcast %cst_52 : f32 to vector<1x16x16xf32>
    %58 = arith.select %56, %50, %57 : vector<1x16x16xi1>, vector<1x16x16xf32>
    %c0_53 = arith.constant 0 : index
    %c8_54 = arith.constant 8 : index
    %c0_55 = arith.constant 0 : index
    %59 = vector.load %arg11[%c0_53, %c8_54, %c0_55] : memref<1x32x16xf32, #tpu.memory_space<vmem>>, vector<1x16x16xf32>
    tpu.vector_store %arg11[%c0_53, %c8_54, %c0_55], %58 {strides = array<i32>} : memref<1x32x16xf32, #tpu.memory_space<vmem>>, vector<1x16x16xf32>,
    %c0_56 = arith.constant 0 : index
    %c0_57 = arith.constant 0 : index
    %60 = vector.load %arg6[%c0_56, %c0_57] : memref<48x16xf32, #tpu.memory_space<vmem>>, vector<48x16xf32>
    %c0_58 = arith.constant 0 : index
    %c0_59 = arith.constant 0 : index
    %c0_60 = arith.constant 0 : index
    %61 = vector.load %arg7[%c0_58, %c0_59, %c0_60] : memref<1x1x16xf32, #tpu.memory_space<vmem>>, vector<1x1x16xf32>
    %c0_61 = arith.constant 0 : index
    %c0_62 = arith.constant 0 : index
    %62 = vector.load %arg8[%c0_61, %c0_62] : memref<40x8xf32, #tpu.memory_space<vmem>>, vector<40x8xf32>
    %c0_63 = arith.constant 0 : index
    %c0_64 = arith.constant 0 : index
    %c0_65 = arith.constant 0 : index
    %63 = vector.load %arg9[%c0_63, %c0_64, %c0_65] : memref<1x1x8xf32, #tpu.memory_space<vmem>>, vector<1x1x8xf32>
    %c0_66 = arith.constant 0 : index
    %c7_67 = arith.constant 7 : index
    %c0_68 = arith.constant 0 : index
    %64 = vector.load %arg11[%c0_66, %c7_67, %c0_68] : memref<1x32x16xf32, #tpu.memory_space<vmem>>, vector<1x16x16xf32>
    %c0_69 = arith.constant 0 : index
    %c8_70 = arith.constant 8 : index
    %c0_71 = arith.constant 0 : index
    %65 = vector.load %arg11[%c0_69, %c8_70, %c0_71] : memref<1x32x16xf32, #tpu.memory_space<vmem>>, vector<1x16x16xf32>
    %c0_72 = arith.constant 0 : index
    %c9_73 = arith.constant 9 : index
    %c0_74 = arith.constant 0 : index
    %66 = vector.load %arg11[%c0_72, %c9_73, %c0_74] : memref<1x32x16xf32, #tpu.memory_space<vmem>>, vector<1x16x16xf32>
    %67 = tpu.concatenate %64, %65, %66 in 2 : vector<1x16x16xf32>, vector<1x16x16xf32>, vector<1x16x16xf32> -> vector<1x16x48xf32>
    %68 = vector.shape_cast %67 : vector<1x16x48xf32> to vector<16x48xf32>
    %cst_75 = arith.constant dense<0.000000e+00> : vector<16x16xf32>
    %69 = tpu.matmul %68, %60, %cst_75 {dimension_numbers = #tpu.dot_dimension_numbers<[1], [0], [0], [1], [0, 0, 1, 1], [], []>} : vector<16x48xf32>, vector<48x16xf32>, vector<16x16xf32> -> vector<16x16xf32>
    %70 = vector.shape_cast %69 : vector<16x16xf32> to vector<1x16x16xf32>
    %71 = vector.broadcast %61 : vector<1x1x16xf32> to vector<1x16x16xf32>
    %72 = arith.addf %70, %71 : vector<1x16x16xf32>
    %73 = vector.extract_strided_slice %72 {offsets = [0, 0, 4], sizes = [1, 16, 8], strides = [1, 1, 1]} : vector<1x16x16xf32> to vector<1x16x8xf32>
    %cst_76 = arith.constant 0.000000e+00 : f32
    %74 = vector.broadcast %cst_76 : f32 to vector<1x16x8xf32>
    %75 = arith.cmpf ogt, %73, %74 : vector<1x16x8xf32>
    %cst_77 = arith.constant 0.00999999977 : f32
    %76 = vector.broadcast %cst_77 : f32 to vector<1x16x8xf32>
    %77 = arith.mulf %76, %73 : vector<1x16x8xf32>
    %78 = arith.select %75, %73, %77 : vector<1x16x8xi1>, vector<1x16x8xf32>
    %cst_78 = arith.constant 0.000000e+00 : f32
    %79 = vector.broadcast %cst_78 : f32 to vector<1x8x8xf32>
    %c0_79 = arith.constant 0 : index
    %c0_80 = arith.constant 0 : index
    %c0_81 = arith.constant 0 : index
    %80 = vector.load %arg13[%c0_79, %c0_80, %c0_81] : memref<1x32x8xf32, #tpu.memory_space<vmem>>, vector<1x8x8xf32>
    tpu.vector_store %arg13[%c0_79, %c0_80, %c0_81], %79 {strides = array<i32>} : memref<1x32x8xf32, #tpu.memory_space<vmem>>, vector<1x8x8xf32>,
    %cst_82 = arith.constant 0.000000e+00 : f32
    %81 = vector.broadcast %cst_82 : f32 to vector<1x8x8xf32>
    %c0_83 = arith.constant 0 : index
    %c24_84 = arith.constant 24 : index
    %c0_85 = arith.constant 0 : index
    %82 = vector.load %arg13[%c0_83, %c24_84, %c0_85] : memref<1x32x8xf32, #tpu.memory_space<vmem>>, vector<1x8x8xf32>
    tpu.vector_store %arg13[%c0_83, %c24_84, %c0_85], %81 {strides = array<i32>} : memref<1x32x8xf32, #tpu.memory_space<vmem>>, vector<1x8x8xf32>,
    %cst_86 = arith.constant 0.000000e+00 : f32
    %83 = vector.shape_cast %3 : vector<1x16x1xi1> to vector<1x16x1xi1>
    %84 = vector.broadcast %83 : vector<1x16x1xi1> to vector<1x16x8xi1>
    %85 = vector.broadcast %cst_86 : f32 to vector<1x16x8xf32>
    %86 = arith.select %84, %78, %85 : vector<1x16x8xi1>, vector<1x16x8xf32>
    %c0_87 = arith.constant 0 : index
    %c8_88 = arith.constant 8 : index
    %c0_89 = arith.constant 0 : index
    %87 = vector.load %arg13[%c0_87, %c8_88, %c0_89] : memref<1x32x8xf32, #tpu.memory_space<vmem>>, vector<1x16x8xf32>
    tpu.vector_store %arg13[%c0_87, %c8_88, %c0_89], %86 {strides = array<i32>} : memref<1x32x8xf32, #tpu.memory_space<vmem>>, vector<1x16x8xf32>,
    %c0_90 = arith.constant 0 : index
    %c6_91 = arith.constant 6 : index
    %c0_92 = arith.constant 0 : index
    %88 = vector.load %arg13[%c0_90, %c6_91, %c0_92] : memref<1x32x8xf32, #tpu.memory_space<vmem>>, vector<1x16x8xf32>
    %c0_93 = arith.constant 0 : index
    %c7_94 = arith.constant 7 : index
    %c0_95 = arith.constant 0 : index
    %89 = vector.load %arg13[%c0_93, %c7_94, %c0_95] : memref<1x32x8xf32, #tpu.memory_space<vmem>>, vector<1x16x8xf32>
    %c0_96 = arith.constant 0 : index
    %c8_97 = arith.constant 8 : index
    %c0_98 = arith.constant 0 : index
    %90 = vector.load %arg13[%c0_96, %c8_97, %c0_98] : memref<1x32x8xf32, #tpu.memory_space<vmem>>, vector<1x16x8xf32>
    %c0_99 = arith.constant 0 : index
    %c9_100 = arith.constant 9 : index
    %c0_101 = arith.constant 0 : index
    %91 = vector.load %arg13[%c0_99, %c9_100, %c0_101] : memref<1x32x8xf32, #tpu.memory_space<vmem>>, vector<1x16x8xf32>
    %c0_102 = arith.constant 0 : index
    %c10_103 = arith.constant 10 : index
    %c0_104 = arith.constant 0 : index
    %92 = vector.load %arg13[%c0_102, %c10_103, %c0_104] : memref<1x32x8xf32, #tpu.memory_space<vmem>>, vector<1x16x8xf32>
    %93 = tpu.concatenate %88, %89, %90, %91, %92 in 2 : vector<1x16x8xf32>, vector<1x16x8xf32>, vector<1x16x8xf32>, vector<1x16x8xf32>, vector<1x16x8xf32> -> vector<1x16x40xf32>
    %94 = vector.shape_cast %93 : vector<1x16x40xf32> to vector<16x40xf32>
    %cst_105 = arith.constant dense<0.000000e+00> : vector<16x8xf32>
    %95 = tpu.matmul %94, %62, %cst_105 {dimension_numbers = #tpu.dot_dimension_numbers<[1], [0], [0], [1], [0, 0, 1, 1], [], []>} : vector<16x40xf32>, vector<40x8xf32>, vector<16x8xf32> -> vector<16x8xf32>
    %96 = vector.shape_cast %95 : vector<16x8xf32> to vector<1x16x8xf32>
    %97 = vector.broadcast %63 : vector<1x1x8xf32> to vector<1x16x8xf32>
    %98 = arith.addf %96, %97 : vector<1x16x8xf32>
    %99 = vector.extract_strided_slice %72 {offsets = [0, 0, 0], sizes = [1, 16, 4], strides = [1, 1, 1]} : vector<1x16x16xf32> to vector<1x16x4xf32>
    %100 = vector.extract_strided_slice %72 {offsets = [0, 0, 12], sizes = [1, 16, 4], strides = [1, 1, 1]} : vector<1x16x16xf32> to vector<1x16x4xf32>
    %101 = tpu.concatenate %99, %98, %100 in 2 : vector<1x16x4xf32>, vector<1x16x8xf32>, vector<1x16x4xf32> -> vector<1x16x16xf32>
    %cst_106 = arith.constant 0.000000e+00 : f32
    %102 = vector.broadcast %cst_106 : f32 to vector<1x16x16xf32>
    %103 = arith.cmpf ogt, %101, %102 : vector<1x16x16xf32>
    %cst_107 = arith.constant 0.00999999977 : f32
    %104 = vector.broadcast %cst_107 : f32 to vector<1x16x16xf32>
    %105 = arith.mulf %104, %101 : vector<1x16x16xf32>
    %106 = arith.select %103, %101, %105 : vector<1x16x16xi1>, vector<1x16x16xf32>
    %c0_108 = arith.constant 0 : index
    %c0_109 = arith.constant 0 : index
    %c0_110 = arith.constant 0 : index
    %107 = vector.load %arg10[%c0_108, %c0_109, %c0_110] : memref<1x16x16xf32, #tpu.memory_space<vmem>>, vector<1x16x16xf32>
    tpu.vector_store %arg10[%c0_108, %c0_109, %c0_110], %106 {strides = array<i32>} : memref<1x16x16xf32, #tpu.memory_space<vmem>>, vector<1x16x16xf32>,
    return
  }
  func.func @transform_0(%arg0: i32) -> (i32, i32, i32) {
    %c0_i32 = arith.constant 0 : i32
    %c0_i32_0 = arith.constant 0 : i32
    %c0_i32_1 = arith.constant 0 : i32
    return %arg0, %c0_i32, %c0_i32_0 : i32, i32, i32
  }
  func.func @transform_1(%arg0: i32) -> (i32, i32) {
    %c0_i32 = arith.constant 0 : i32
    %c0_i32_0 = arith.constant 0 : i32
    %c0_i32_1 = arith.constant 0 : i32
    return %c0_i32, %c0_i32_0 : i32, i32
  }
  func.func @transform_2(%arg0: i32) -> (i32, i32, i32) {
    %c0_i32 = arith.constant 0 : i32
    %c0_i32_0 = arith.constant 0 : i32
    %c0_i32_1 = arith.constant 0 : i32
    %c0_i32_2 = arith.constant 0 : i32
    return %c0_i32, %c0_i32_0, %c0_i32_1 : i32, i32, i32
  }
  func.func @transform_3(%arg0: i32) -> (i32, i32) {
    %c0_i32 = arith.constant 0 : i32
    %c0_i32_0 = arith.constant 0 : i32
    %c0_i32_1 = arith.constant 0 : i32
    return %c0_i32, %c0_i32_0 : i32, i32
  }
  func.func @transform_4(%arg0: i32) -> (i32, i32, i32) {
    %c0_i32 = arith.constant 0 : i32
    %c0_i32_0 = arith.constant 0 : i32
    %c0_i32_1 = arith.constant 0 : i32
    %c0_i32_2 = arith.constant 0 : i32
    return %c0_i32, %c0_i32_0, %c0_i32_1 : i32, i32, i32
  }
  func.func @transform_5(%arg0: i32) -> (i32, i32) {
    %c0_i32 = arith.constant 0 : i32
    %c0_i32_0 = arith.constant 0 : i32
    %c0_i32_1 = arith.constant 0 : i32
    return %c0_i32, %c0_i32_0 : i32, i32
  }
  func.func @transform_6(%arg0: i32) -> (i32, i32, i32) {
    %c0_i32 = arith.constant 0 : i32
    %c0_i32_0 = arith.constant 0 : i32
    %c0_i32_1 = arith.constant 0 : i32
    %c0_i32_2 = arith.constant 0 : i32
    return %c0_i32, %c0_i32_0, %c0_i32_1 : i32, i32, i32
  }
  func.func @transform_7(%arg0: i32) -> (i32, i32) {
    %c0_i32 = arith.constant 0 : i32
    %c0_i32_0 = arith.constant 0 : i32
    %c0_i32_1 = arith.constant 0 : i32
    return %c0_i32, %c0_i32_0 : i32, i32
  }
  func.func @transform_8(%arg0: i32) -> (i32, i32, i32) {
    %c0_i32 = arith.constant 0 : i32
    %c0_i32_0 = arith.constant 0 : i32
    %c0_i32_1 = arith.constant 0 : i32
    %c0_i32_2 = arith.constant 0 : i32
    return %c0_i32, %c0_i32_0, %c0_i32_1 : i32, i32, i32
  }
  func.func @transform_9(%arg0: i32) -> (i32, i32, i32) {
    %c0_i32 = arith.constant 0 : i32
    %c0_i32_0 = arith.constant 0 : i32
    %c0_i32_1 = arith.constant 0 : i32
    return %arg0, %c0_i32, %c0_i32_0 : i32, i32, i32
  }
}

</mosaic_0001>

<llo_original>
// kernel: tpu_custom_call.1
$region0: #{tpu_custom_call.1}
  #allocation0 [shape = 'u32[]', space=smem, size = 0x4, offset = 0x4, fixed_abs, tag = 'smem constant byte address 0x4 - core index']
  #allocation1 [shape = 'u32[72,128]{1,0:T(1,128)}', space=vmem, size = 0x9000, scoped, tag = 'internal scratch']
  #allocation2 [shape = 'f32[1,32,16]{2,1,0:T(8,128)}', space=vmem, size = 0x4000, scoped, tag = 'scratch operand']
  #allocation3 [shape = 'f32[1,32,8]{2,1,0:T(8,128)}', space=vmem, size = 0x4000, scoped, tag = 'scratch operand']
  #allocation4 [shape = 'f32[1,32,8]{2,1,0:T(8,128)}', space=vmem, size = 0x4000, scoped, tag = 'scratch operand']
  %s0 = inlined_call_operand.vmem [shape: f32[2,32,4], index: 0, kind: input, shape index: {}]
  %s1 = inlined_call_operand.vmem [shape: f32[12,16], index: 1, kind: input, shape index: {}]
  %s2 = inlined_call_operand.vmem [shape: f32[1,1,16], index: 2, kind: input, shape index: {}]
  %s3 = inlined_call_operand.vmem [shape: f32[40,8], index: 3, kind: input, shape index: {}]
  %s4 = inlined_call_operand.vmem [shape: f32[1,1,8], index: 4, kind: input, shape index: {}]
  %s5 = inlined_call_operand.vmem [shape: f32[48,16], index: 5, kind: input, shape index: {}]
  %s6 = inlined_call_operand.vmem [shape: f32[1,1,16], index: 6, kind: input, shape index: {}]
  %s7 = inlined_call_operand.vmem [shape: f32[40,8], index: 7, kind: input, shape index: {}]
  %s8 = inlined_call_operand.vmem [shape: f32[1,1,8], index: 8, kind: input, shape index: {}]
  %s9 = inlined_call_operand.hbm [shape: f32[2,16,16], index: 9, kind: output, shape index: {}]
  %s10 = sld [smem:[#allocation0]]
  $region69: #{tpu_custom_call.1} parent=0
    _
  %s12 = ssub.s32 1, %s10
  %s13 = scalar_select 0, %s12, %s10
  $region1: #{tpu_custom_call.1} parent=0
    #allocation5 [shape = 'u8[16384]{0}', space=vmem, size = 0x4000, scoped, tag = 'output window, operand 0']
    #allocation6 [shape = 's32[2]{0}', space=sflag, size = 0x8, scoped, tag = 'scoped memory for tpu_custom_call.1']
    %14 = vsyncpa [#allocation6], 0
    %s15 = scalar_lea.sflag [#allocation6], 1
    %16 = vsyncpa %s15, 0
    loop: start=0, step=1, limit=4
    $region2: #{tpu_custom_call.1} parent=1 // loop_pre_header
      _
    $region3: #{tpu_custom_call.1} parent=1 // loop_header
      %s18 = sphi 0, %s22
      %p19 = scmp.ge.s32.totalorder %s18, 4
      %s28 = sphi 0, %s30
      %s31 = sphi 0, %s28
      %s32 = sphi 0, %s31
      %s48 = sphi 0, %s32
      %s52 = sphi 0, %s52
      %s54 = sphi 0, %s52
      %s55 = sphi 0, %s54
      %s69 = sphi 0, %s55
      %s73 = sphi 0, %s73
      %s75 = sphi 0, %s73
      %s76 = sphi 0, %s75
      %s90 = sphi 0, %s76
      %s94 = sphi 0, %s94
      %s96 = sphi 0, %s94
      %s97 = sphi 0, %s96
      %s111 = sphi 0, %s97
      %s115 = sphi 0, %s115
      %s117 = sphi 0, %s115
      %s118 = sphi 0, %s117
      %s132 = sphi 0, %s118
      %s136 = sphi 0, %s136
      %s138 = sphi 0, %s136
      %s139 = sphi 0, %s138
      %s153 = sphi 0, %s139
      %s157 = sphi 0, %s157
      %s159 = sphi 0, %s157
      %s160 = sphi 0, %s159
      %s174 = sphi 0, %s160
      %s178 = sphi 0, %s178
      %s180 = sphi 0, %s178
      %s181 = sphi 0, %s180
      %s195 = sphi 0, %s181
      %s199 = sphi 0, %s199
      %s201 = sphi 0, %s199
      %s202 = sphi 0, %s201
      %s216 = sphi 0, %s202
      %s222 = sphi 0, %s224
      %s225 = sphi 0, %s222
      %s226 = sphi 0, %s225
      %s242 = sphi 0, %s226
    $region4: #{tpu_custom_call.1} parent=1 // loop_header_branch
      %21 = sbr.rel (%p19) target = $region8
    $region5: #{tpu_custom_call.1} parent=1 // loop_body
      %s23 = ssub.s32 %s18, 1
      %s24 = ssub.s32 %s18, 2
      %s25 = sadd.s32 %s18, 1
      %s26 = ssub.s32 %s18, %s25
      %p27 = scmp.eq.s32.totalorder %s26, 0
      %s29 = sadd.s32 %s28, 1
      %s30 = scalar_select %p27, %s28, %s29
      %p33 = pneg %p27
      %p34 = scmp.eq.s32.totalorder %s18, 1
      %p35 = por %p33, %p34
      %p36 = scmp.ne.s32.totalorder %s28, %s31
      %p37 = scmp.eq.s32.totalorder %s18, 0
      %p38 = por %p36, %p37
      %p39 = scmp.ne.s32.totalorder %s28, %s31
      %p40 = scmp.eq.s32.totalorder %s23, 1
      %p41 = por %p39, %p40
      %p42 = scmp.ne.s32.totalorder %s31, %s32
      %p43 = scmp.eq.s32.totalorder %s23, 0
      %p44 = por %p42, %p43
      %p45 = scmp.ne.s32.totalorder %s31, %s32
      %p46 = scmp.eq.s32.totalorder %s24, 1
      %p47 = por %p45, %p46
      %p49 = scmp.ne.s32.totalorder %s32, %s48
      %p50 = scmp.eq.s32.totalorder %s24, 0
      %p51 = por %p49, %p50
      %s53 = sadd.s32 %s52, 1
      %p56 = scmp.eq.s32.totalorder %s18, 1
      %p57 = scmp.ne.s32.totalorder %s52, %s54
      %p58 = scmp.eq.s32.totalorder %s18, 0
      %p59 = por %p57, %p58
      %p60 = scmp.ne.s32.totalorder %s52, %s54
      %p61 = scmp.eq.s32.totalorder %s23, 1
      %p62 = por %p60, %p61
      %p63 = scmp.ne.s32.totalorder %s54, %s55
      %p64 = scmp.eq.s32.totalorder %s23, 0
      %p65 = por %p63, %p64
      %p66 = scmp.ne.s32.totalorder %s54, %s55
      %p67 = scmp.eq.s32.totalorder %s24, 1
      %p68 = por %p66, %p67
      %p70 = scmp.ne.s32.totalorder %s55, %s69
      %p71 = scmp.eq.s32.totalorder %s24, 0
      %p72 = por %p70, %p71
      %s74 = sadd.s32 %s73, 1
      %p77 = scmp.eq.s32.totalorder %s18, 1
      %p78 = scmp.ne.s32.totalorder %s73, %s75
      %p79 = scmp.eq.s32.totalorder %s18, 0
      %p80 = por %p78, %p79
      %p81 = scmp.ne.s32.totalorder %s73, %s75
      %p82 = scmp.eq.s32.totalorder %s23, 1
      %p83 = por %p81, %p82
      %p84 = scmp.ne.s32.totalorder %s75, %s76
      %p85 = scmp.eq.s32.totalorder %s23, 0
      %p86 = por %p84, %p85
      %p87 = scmp.ne.s32.totalorder %s75, %s76
      %p88 = scmp.eq.s32.totalorder %s24, 1
      %p89 = por %p87, %p88
      %p91 = scmp.ne.s32.totalorder %s76, %s90
      %p92 = scmp.eq.s32.totalorder %s24, 0
      %p93 = por %p91, %p92
      %s95 = sadd.s32 %s94, 1
      %p98 = scmp.eq.s32.totalorder %s18, 1
      %p99 = scmp.ne.s32.totalorder %s94, %s96
      %p100 = scmp.eq.s32.totalorder %s18, 0
      %p101 = por %p99, %p100
      %p102 = scmp.ne.s32.totalorder %s94, %s96
      %p103 = scmp.eq.s32.totalorder %s23, 1
      %p104 = por %p102, %p103
      %p105 = scmp.ne.s32.totalorder %s96, %s97
      %p106 = scmp.eq.s32.totalorder %s23, 0
      %p107 = por %p105, %p106
      %p108 = scmp.ne.s32.totalorder %s96, %s97
      %p109 = scmp.eq.s32.totalorder %s24, 1
      %p110 = por %p108, %p109
      %p112 = scmp.ne.s32.totalorder %s97, %s111
      %p113 = scmp.eq.s32.totalorder %s24, 0
      %p114 = por %p112, %p113
      %s116 = sadd.s32 %s115, 1
      %p119 = scmp.eq.s32.totalorder %s18, 1
      %p120 = scmp.ne.s32.totalorder %s115, %s117
      %p121 = scmp.eq.s32.totalorder %s18, 0
      %p122 = por %p120, %p121
      %p123 = scmp.ne.s32.totalorder %s115, %s117
      %p124 = scmp.eq.s32.totalorder %s23, 1
      %p125 = por %p123, %p124
      %p126 = scmp.ne.s32.totalorder %s117, %s118
      %p127 = scmp.eq.s32.totalorder %s23, 0
      %p128 = por %p126, %p127
      %p129 = scmp.ne.s32.totalorder %s117, %s118
      %p130 = scmp.eq.s32.totalorder %s24, 1
      %p131 = por %p129, %p130
      %p133 = scmp.ne.s32.totalorder %s118, %s132
      %p134 = scmp.eq.s32.totalorder %s24, 0
      %p135 = por %p133, %p134
      %s137 = sadd.s32 %s136, 1
      %p140 = scmp.eq.s32.totalorder %s18, 1
      %p141 = scmp.ne.s32.totalorder %s136, %s138
      %p142 = scmp.eq.s32.totalorder %s18, 0
      %p143 = por %p141, %p142
      %p144 = scmp.ne.s32.totalorder %s136, %s138
      %p145 = scmp.eq.s32.totalorder %s23, 1
      %p146 = por %p144, %p145
      %p147 = scmp.ne.s32.totalorder %s138, %s139
      %p148 = scmp.eq.s32.totalorder %s23, 0
      %p149 = por %p147, %p148
      %p150 = scmp.ne.s32.totalorder %s138, %s139
      %p151 = scmp.eq.s32.totalorder %s24, 1
      %p152 = por %p150, %p151
      %p154 = scmp.ne.s32.totalorder %s139, %s153
      %p155 = scmp.eq.s32.totalorder %s24, 0
      %p156 = por %p154, %p155
      %s158 = sadd.s32 %s157, 1
      %p161 = scmp.eq.s32.totalorder %s18, 1
      %p162 = scmp.ne.s32.totalorder %s157, %s159
      %p163 = scmp.eq.s32.totalorder %s18, 0
      %p164 = por %p162, %p163
      %p165 = scmp.ne.s32.totalorder %s157, %s159
      %p166 = scmp.eq.s32.totalorder %s23, 1
      %p167 = por %p165, %p166
      %p168 = scmp.ne.s32.totalorder %s159, %s160
      %p169 = scmp.eq.s32.totalorder %s23, 0
      %p170 = por %p168, %p169
      %p171 = scmp.ne.s32.totalorder %s159, %s160
      %p172 = scmp.eq.s32.totalorder %s24, 1
      %p173 = por %p171, %p172
      %p175 = scmp.ne.s32.totalorder %s160, %s174
      %p176 = scmp.eq.s32.totalorder %s24, 0
      %p177 = por %p175, %p176
      %s179 = sadd.s32 %s178, 1
      %p182 = scmp.eq.s32.totalorder %s18, 1
      %p183 = scmp.ne.s32.totalorder %s178, %s180
      %p184 = scmp.eq.s32.totalorder %s18, 0
      %p185 = por %p183, %p184
      %p186 = scmp.ne.s32.totalorder %s178, %s180
      %p187 = scmp.eq.s32.totalorder %s23, 1
      %p188 = por %p186, %p187
      %p189 = scmp.ne.s32.totalorder %s180, %s181
      %p190 = scmp.eq.s32.totalorder %s23, 0
      %p191 = por %p189, %p190
      %p192 = scmp.ne.s32.totalorder %s180, %s181
      %p193 = scmp.eq.s32.totalorder %s24, 1
      %p194 = por %p192, %p193
      %p196 = scmp.ne.s32.totalorder %s181, %s195
      %p197 = scmp.eq.s32.totalorder %s24, 0
      %p198 = por %p196, %p197
      %s200 = sadd.s32 %s199, 1
      %p203 = scmp.eq.s32.totalorder %s18, 1
      %p204 = scmp.ne.s32.totalorder %s199, %s201
      %p205 = scmp.eq.s32.totalorder %s18, 0
      %p206 = por %p204, %p205
      %p207 = scmp.ne.s32.totalorder %s199, %s201
      %p208 = scmp.eq.s32.totalorder %s23, 1
      %p209 = por %p207, %p208
      %p210 = scmp.ne.s32.totalorder %s201, %s202
      %p211 = scmp.eq.s32.totalorder %s23, 0
      %p212 = por %p210, %p211
      %p213 = scmp.ne.s32.totalorder %s201, %s202
      %p214 = scmp.eq.s32.totalorder %s24, 1
      %p215 = por %p213, %p214
      %p217 = scmp.ne.s32.totalorder %s202, %s216
      %p218 = scmp.eq.s32.totalorder %s24, 0
      %p219 = por %p217, %p218
      %s220 = ssub.s32 %s18, %s25
      %p221 = scmp.eq.s32.totalorder %s220, 0
      %s223 = sadd.s32 %s222, 1
      %s224 = scalar_select %p221, %s222, %s223
      %p227 = pneg %p221
      %p228 = scmp.eq.s32.totalorder %s18, 1
      %p229 = por %p227, %p228
      %p230 = scmp.ne.s32.totalorder %s222, %s225
      %p231 = scmp.eq.s32.totalorder %s18, 0
      %p232 = por %p230, %p231
      %p233 = scmp.ne.s32.totalorder %s222, %s225
      %p234 = scmp.eq.s32.totalorder %s23, 1
      %p235 = por %p233, %p234
      %p236 = scmp.ne.s32.totalorder %s225, %s226
      %p237 = scmp.eq.s32.totalorder %s23, 0
      %p238 = por %p236, %p237
      %p239 = scmp.ne.s32.totalorder %s225, %s226
      %p240 = scmp.eq.s32.totalorder %s24, 1
      %p241 = por %p239, %p240
      %p243 = scmp.ne.s32.totalorder %s226, %s242
      %p244 = scmp.eq.s32.totalorder %s24, 0
      %p245 = por %p243, %p244
      %p246 = scmp.le.s32.totalorder 1, %s18
      %p247 = scmp.lt.s32.totalorder %s18, 3
      %p248 = pnand %p246, %p247
      %p249 = pneg %p248
      // Predicated region
      $region9: #{tpu_custom_call.1} parent=5 // pred_check
        _
      $region10: #{tpu_custom_call.1} parent=5 // pred_check_branch
        %251 = sbr.rel (%p248) target = $region12
      $region11: #{tpu_custom_call.1} parent=5 // pred_region
        %s252 = ssub.s32 %s18, 1
        // Predicated region
        $region13: #{tpu_custom_call.1} parent=11 // pred_check
          %p253 = pneg %p65
        $region14: #{tpu_custom_call.1} parent=11 // pred_check_branch
          %255 = sbr.rel (%p253) target = $region16
        $region15: #{tpu_custom_call.1} parent=11 // pred_region
          _
        $region16: #{tpu_custom_call.1} parent=11 // pred_fallthru
          _
        // Predicated region
        $region17: #{tpu_custom_call.1} parent=11 // pred_check
          %p256 = pneg %p86
        $region18: #{tpu_custom_call.1} parent=11 // pred_check_branch
          %258 = sbr.rel (%p256) target = $region20
        $region19: #{tpu_custom_call.1} parent=11 // pred_region
          _
        $region20: #{tpu_custom_call.1} parent=11 // pred_fallthru
          _
        // Predicated region
        $region21: #{tpu_custom_call.1} parent=11 // pred_check
          %p259 = pneg %p107
        $region22: #{tpu_custom_call.1} parent=11 // pred_check_branch
          %261 = sbr.rel (%p259) target = $region24
        $region23: #{tpu_custom_call.1} parent=11 // pred_region
          _
        $region24: #{tpu_custom_call.1} parent=11 // pred_fallthru
          _
        // Predicated region
        $region25: #{tpu_custom_call.1} parent=11 // pred_check
          %p262 = pneg %p128
        $region26: #{tpu_custom_call.1} parent=11 // pred_check_branch
          %264 = sbr.rel (%p262) target = $region28
        $region27: #{tpu_custom_call.1} parent=11 // pred_region
          _
        $region28: #{tpu_custom_call.1} parent=11 // pred_fallthru
          _
        // Predicated region
        $region29: #{tpu_custom_call.1} parent=11 // pred_check
          %p265 = pneg %p149
        $region30: #{tpu_custom_call.1} parent=11 // pred_check_branch
          %267 = sbr.rel (%p265) target = $region32
        $region31: #{tpu_custom_call.1} parent=11 // pred_region
          _
        $region32: #{tpu_custom_call.1} parent=11 // pred_fallthru
          _
        // Predicated region
        $region33: #{tpu_custom_call.1} parent=11 // pred_check
          %p268 = pneg %p170
        $region34: #{tpu_custom_call.1} parent=11 // pred_check_branch
          %270 = sbr.rel (%p268) target = $region36
        $region35: #{tpu_custom_call.1} parent=11 // pred_region
          _
        $region36: #{tpu_custom_call.1} parent=11 // pred_fallthru
          _
        // Predicated region
        $region37: #{tpu_custom_call.1} parent=11 // pred_check
          %p271 = pneg %p191
        $region38: #{tpu_custom_call.1} parent=11 // pred_check_branch
          %273 = sbr.rel (%p271) target = $region40
        $region39: #{tpu_custom_call.1} parent=11 // pred_region
          _
        $region40: #{tpu_custom_call.1} parent=11 // pred_fallthru
          _
        // Predicated region
        $region41: #{tpu_custom_call.1} parent=11 // pred_check
          %p274 = pneg %p212
        $region42: #{tpu_custom_call.1} parent=11 // pred_check_branch
          %276 = sbr.rel (%p274) target = $region44
        $region43: #{tpu_custom_call.1} parent=11 // pred_region
          _
        $region44: #{tpu_custom_call.1} parent=11 // pred_fallthru
          _
      $region12: #{tpu_custom_call.1} parent=5 // pred_fallthru
        _
      %p277 = scmp.lt.s32.totalorder %s18, 2
      // Predicated region
      $region45: #{tpu_custom_call.1} parent=5 // pred_check
        %p278 = pneg %p277
      $region46: #{tpu_custom_call.1} parent=5 // pred_check_branch
        %280 = sbr.rel (%p278) target = $region48
      $region47: #{tpu_custom_call.1} parent=5 // pred_region
        // Predicated region
        $region49: #{tpu_custom_call.1} parent=47 // pred_check
          %p281 = pneg %p38
        $region50: #{tpu_custom_call.1} parent=47 // pred_check_branch
          %283 = sbr.rel (%p281) target = $region52
        $region51: #{tpu_custom_call.1} parent=47 // pred_region
          %p284 = scmp.lt.s32.totalorder %s18, 1
          %s285 = scalar_select %p284, %s18, 1
          %s286 = smul.addr %s285, 4
          %s287 = smul.addr %s286, 8
          %s288 = scalar_lea.vmem %s0, %s287
        $region52: #{tpu_custom_call.1} parent=47 // pred_fallthru
          _
      $region48: #{tpu_custom_call.1} parent=5 // pred_fallthru
        _
      %p289 = scmp.le.s32.totalorder 1, %s18
      %p290 = scmp.lt.s32.totalorder %s18, 3
      %p291 = pnand %p289, %p290
      %p292 = pneg %p291
      // Predicated region
      $region53: #{tpu_custom_call.1} parent=5 // pred_check
        _
      $region54: #{tpu_custom_call.1} parent=5 // pred_check_branch
        %294 = sbr.rel (%p291) target = $region56
      $region55: #{tpu_custom_call.1} parent=5 // pred_region
        %s295 = ssub.s32 %s18, 1
        %p296 = scmp.lt.s32.totalorder %s23, 1
        %s297 = scalar_select %p296, %s23, 1
        %s298 = smul.addr %s297, 4
        %s299 = smul.addr %s298, 8
        %s300 = scalar_lea.vmem %s0, %s299
        %p301 = pneg %p44
        %p302 = pneg %p41
        %p303 = pneg %p65
        %p304 = pneg %p62
        %p305 = pneg %p86
        %p306 = pneg %p83
        %p307 = pneg %p107
        %p308 = pneg %p104
        %p309 = pneg %p128
        %p310 = pneg %p125
        %p311 = pneg %p149
        %p312 = pneg %p146
        %p313 = pneg %p170
        %p314 = pneg %p167
        %p315 = pneg %p191
        %p316 = pneg %p188
        %p317 = pneg %p212
        %p318 = pneg %p209
        %p319 = pneg %p238
        %p320 = pneg %p235
        %s321 = sand.u32 %s225, 1
        %s322 = scalar_lea.sflag [#allocation6], %s321
        %s323 = sand.u32 %s225, 1
        %s324 = smul.addr %s323, 16
        %s325 = scalar_lea.vmem [#allocation5], %s324
        %p326 = scmp.lt.s32.totalorder %s23, 1
        %s327 = scalar_select %p326, %s23, 1
        %s328 = smul.addr %s327, 4
        %s329 = smul.addr %s328, 8
        %s330 = scalar_lea.vmem %s0, %s329
        %v331 = vlaneseq
        %v332 = vshrl.u32 %v331, 7
        %v333 = vadd.s32 %v332, 8
        %vm334 = vcmp.lt.s32.totalorder %v332, 16
        %vm335 = vcmp.lt.s32.totalorder %v333, 16
        %v336 = vld [vmem:[%s1] sm:$0xff]
        %v337 = vld [vmem:[%s1 + $0x8] sm:$0xf]
        %v338 = vld [vmem:[%s2] sm:$0x1]
        %v339 = vld [vmem:[%s3] sm:$0xff]
        %v340 = vld [vmem:[%s3 + $0x8] sm:$0xff]
        %v341 = vld [vmem:[%s3 + $0x10] sm:$0xff]
        %v342 = vld [vmem:[%s3 + $0x18] sm:$0xff]
        %v343 = vld [vmem:[%s3 + $0x20] sm:$0xff]
        %v344 = vld [vmem:[%s4] sm:$0x1]
        %v345 = vld [vmem:[%s330 + $0x7] sm:$0xff]
        %v346 = vld [vmem:[%s330 + $0xf] sm:$0xff]
        %v347 = vld [vmem:[%s330 + $0x8] sm:$0xff]
        %v348 = vld [vmem:[%s330 + $0x10] sm:$0xff]
        %v349 = vld [vmem:[%s330 + $0x9] sm:$0xff]
        %v350 = vld [vmem:[%s330 + $0x11] sm:$0xff]
        %353 = vrot.lane.b32.xlu0 %v347, 4
        %v354 = vpop.permute.xlu0 %353
        %355 = vrot.lane.b32.xlu0 %v348, 4
        %v356 = vpop.permute.xlu0 %355
        %361 = vrot.lane.b32.xlu0 %v349, 8
        %v362 = vpop.permute.xlu0 %361
        %363 = vrot.lane.b32.xlu0 %v350, 8
        %v364 = vpop.permute.xlu0 %363
        %vm367 = vcmask 31744
        %v368 = vsel %vm367, %v345, %v354
        %v369 = vsel %vm367, %v346, %v356
        %vm370 = vcmask 64512
        %v371 = vsel %vm370, %v368, %v362
        %v372 = vsel %vm370, %v369, %v364
        %vm373 = vcmask 97280
        %v375 = vsel %vm373, %v371, 0
        %v378 = vsel %vm373, %v372, 0
        %vm380 = vcmask 1043456
        %v382 = vsel %vm380, %v337, 0
        %384 = vmatpush.msra.mxu0 0.0
        %385 = vmatpush.msra.mxu0 0.0
        %386 = vmatpush.msra.mxu0 0.0
        %387 = vmatpush.msra.mxu0 0.0
        %388 = vmatpush.msra.mxu0 0.0
        %389 = vmatpush.msra.mxu0 0.0
        %390 = vmatpush.msra.mxu0 0.0
        %391 = vmatpush.msra.mxu0 0.0
        %392 = vmatpush.msra.mxu0 0.0
        %393 = vmatpush.msra.mxu0 0.0
        %394 = vmatpush.msra.mxu0 0.0
        %395 = vmatpush.msra.mxu0 0.0
        %396 = vmatpush.msra.mxu0 0.0
        %397 = vmatpush.msra.mxu0 0.0
        %398 = vmatpush.msra.mxu0 %v382
        %399 = vmatpush.msra.mxu0 %v336
        %400 = vmatmul.f32.gmra.mxu0 %v375
        %v401 = vpop.f32.mrf.mxu0
        %v402 = vadd.f32 0.0, %v401
        %403 = vmatmul.f32.gmra.mxu0 %v378
        %v404 = vpop.f32.mrf.mxu0
        %v405 = vadd.f32 0.0, %v404
        %406 = vdwg.mxu0
        %v408 = vperm.slane %v338, 0
        %v410 = vadd.f32 %v402, %v408
        %v411 = vadd.f32 %v405, %v408
        %vm412 = vcmp.gt.f32.partialorder %v410, 0.0
        %vm413 = vcmp.gt.f32.partialorder %v411, 0.0
        %v414 = vmul.f32 %v410, 0.01
        %v415 = vmul.f32 %v411, 0.01
        %v416 = vsel %vm412, %v410, %v414
        %v417 = vsel %vm413, %v411, %v415
        %418 = vst.msk [vmem:[#allocation3] sm:$0xff] %vm370, 0.0
        %419 = vst.msk [vmem:[#allocation3 + $0x18] sm:$0xff] %vm370, 0.0
        %v420 = vsel %vm334, 1, 0
        %v421 = vsel %vm335, 1, 0
        %vm422 = vcmp.eq.s32.totalorder %v420, 1
        %vm423 = vcmp.eq.s32.totalorder %v421, 1
        %v424 = vsel %vm422, %v416, 0.0
        %v425 = vsel %vm423, %v417, 0.0
        %428 = vrot.lane.b32.xlu0 %v424, 124
        %v429 = vpop.permute.xlu0 %428
        %430 = vrot.lane.b32.xlu0 %v425, 124
        %v431 = vpop.permute.xlu0 %430
        %434 = vst.msk [vmem:[#allocation3 + $0x8] sm:$0xff] %vm370, %v429
        %435 = vst.msk [vmem:[#allocation3 + $0x10] sm:$0xff] %vm370, %v431
        %v436 = vld [vmem:[#allocation3 + $0x6] sm:$0xff]
        %v437 = vld [vmem:[#allocation3 + $0xe] sm:$0xff]
        %v438 = vld [vmem:[#allocation3 + $0x7] sm:$0xff]
        %v439 = vld [vmem:[#allocation3 + $0xf] sm:$0xff]
        %v440 = vld [vmem:[#allocation3 + $0x8] sm:$0xff]
        %v441 = vld [vmem:[#allocation3 + $0x10] sm:$0xff]
        %v442 = vld [vmem:[#allocation3 + $0x9] sm:$0xff]
        %v443 = vld [vmem:[#allocation3 + $0x11] sm:$0xff]
        %v444 = vld [vmem:[#allocation3 + $0xa] sm:$0xff]
        %v445 = vld [vmem:[#allocation3 + $0x12] sm:$0xff]
        %448 = vrot.lane.b32.xlu0 %v438, 8
        %v449 = vpop.permute.xlu0 %448
        %450 = vrot.lane.b32.xlu0 %v439, 8
        %v451 = vpop.permute.xlu0 %450
        %456 = vrot.lane.b32.xlu0 %v440, 16
        %v457 = vpop.permute.xlu0 %456
        %458 = vrot.lane.b32.xlu0 %v441, 16
        %v459 = vpop.permute.xlu0 %458
        %464 = vrot.lane.b32.xlu0 %v442, 24
        %v465 = vpop.permute.xlu0 %464
        %466 = vrot.lane.b32.xlu0 %v443, 24
        %v467 = vpop.permute.xlu0 %466
        %472 = vrot.lane.b32.xlu0 %v444, 32
        %v473 = vpop.permute.xlu0 %472
        %474 = vrot.lane.b32.xlu0 %v445, 32
        %v475 = vpop.permute.xlu0 %474
        %v478 = vsel %vm370, %v436, %v449
        %v479 = vsel %vm370, %v437, %v451
        %vm480 = vcmask 130048
        %v481 = vsel %vm480, %v478, %v457
        %v482 = vsel %vm480, %v479, %v459
        %vm483 = vcmask 195584
        %v484 = vsel %vm483, %v481, %v465
        %v485 = vsel %vm483, %v482, %v467
        %vm486 = vcmask 261120
        %v487 = vsel %vm486, %v484, %v473
        %v488 = vsel %vm486, %v485, %v475
        %vm489 = vcmask 326656
        %v491 = vsel %vm489, %v487, 0
        %v494 = vsel %vm489, %v488, 0
        %496 = vmatpush.msra.mxu0 0.0
        %497 = vmatpush.msra.mxu0 0.0
        %498 = vmatpush.msra.mxu0 0.0
        %499 = vmatpush.msra.mxu0 0.0
        %500 = vmatpush.msra.mxu0 0.0
        %501 = vmatpush.msra.mxu0 0.0
        %502 = vmatpush.msra.mxu0 0.0
        %503 = vmatpush.msra.mxu0 0.0
        %504 = vmatpush.msra.mxu0 0.0
        %505 = vmatpush.msra.mxu0 0.0
        %506 = vmatpush.msra.mxu0 0.0
        %507 = vmatpush.msra.mxu0 %v343
        %508 = vmatpush.msra.mxu0 %v342
        %509 = vmatpush.msra.mxu0 %v341
        %510 = vmatpush.msra.mxu0 %v340
        %511 = vmatpush.msra.mxu0 %v339
        %512 = vmatmul.f32.gmra.mxu0 %v491
        %v513 = vpop.f32.mrf.mxu0
        %v514 = vadd.f32 0.0, %v513
        %515 = vmatmul.f32.gmra.mxu0 %v494
        %v516 = vpop.f32.mrf.mxu0
        %v517 = vadd.f32 0.0, %v516
        %518 = vdwg.mxu0
        %v520 = vperm.slane %v344, 0
        %v522 = vadd.f32 %v514, %v520
        %v523 = vadd.f32 %v517, %v520
        %526 = vrot.lane.b32.xlu0 %v522, 4
        %v527 = vpop.permute.xlu0 %526
        %528 = vrot.lane.b32.xlu0 %v523, 4
        %v529 = vpop.permute.xlu0 %528
        %v532 = vsel %vm367, %v410, %v527
        %v533 = vsel %vm367, %v411, %v529
        %v534 = vsel %vm373, %v532, %v410
        %v535 = vsel %vm373, %v533, %v411
        %vm536 = vcmp.gt.f32.partialorder %v534, 0.0
        %vm537 = vcmp.gt.f32.partialorder %v535, 0.0
        %v538 = vmul.f32 %v534, 0.01
        %v539 = vmul.f32 %v535, 0.01
        %v540 = vsel %vm536, %v534, %v538
        %v541 = vsel %vm537, %v535, %v539
        %542 = vst.msk [vmem:[#allocation2] sm:$0xff] %vm480, 0.0
        %543 = vst.msk [vmem:[#allocation2 + $0x18] sm:$0xff] %vm480, 0.0
        %v544 = vsel %vm422, %v540, 0.0
        %v545 = vsel %vm423, %v541, 0.0
        %546 = vst.msk [vmem:[#allocation2 + $0x8] sm:$0xff] %vm480, %v544
        %547 = vst.msk [vmem:[#allocation2 + $0x10] sm:$0xff] %vm480, %v545
        %v548 = vld [vmem:[%s5] sm:$0xff]
        %v549 = vld [vmem:[%s5 + $0x8] sm:$0xff]
        %v550 = vld [vmem:[%s5 + $0x10] sm:$0xff]
        %v551 = vld [vmem:[%s5 + $0x18] sm:$0xff]
        %v552 = vld [vmem:[%s5 + $0x20] sm:$0xff]
        %v553 = vld [vmem:[%s5 + $0x28] sm:$0xff]
        %v554 = vld [vmem:[%s6] sm:$0x1]
        %v555 = vld [vmem:[%s7] sm:$0xff]
        %v556 = vld [vmem:[%s7 + $0x8] sm:$0xff]
        %v557 = vld [vmem:[%s7 + $0x10] sm:$0xff]
        %v558 = vld [vmem:[%s7 + $0x18] sm:$0xff]
        %v559 = vld [vmem:[%s7 + $0x20] sm:$0xff]
        %v560 = vld [vmem:[%s8] sm:$0x1]
        %v561 = vld [vmem:[#allocation2 + $0x7] sm:$0xff]
        %v562 = vld [vmem:[#allocation2 + $0xf] sm:$0xff]
        %v563 = vld [vmem:[#allocation2 + $0x8] sm:$0xff]
        %v564 = vld [vmem:[#allocation2 + $0x10] sm:$0xff]
        %v565 = vld [vmem:[#allocation2 + $0x9] sm:$0xff]
        %v566 = vld [vmem:[#allocation2 + $0x11] sm:$0xff]
        %569 = vrot.lane.b32.xlu0 %v563, 16
        %v570 = vpop.permute.xlu0 %569
        %571 = vrot.lane.b32.xlu0 %v564, 16
        %v572 = vpop.permute.xlu0 %571
        %577 = vrot.lane.b32.xlu0 %v565, 32
        %v578 = vpop.permute.xlu0 %577
        %579 = vrot.lane.b32.xlu0 %v566, 32
        %v580 = vpop.permute.xlu0 %579
        %v583 = vsel %vm480, %v561, %v570
        %v584 = vsel %vm480, %v562, %v572
        %v585 = vsel %vm486, %v583, %v578
        %v586 = vsel %vm486, %v584, %v580
        %vm587 = vcmask 392192
        %v589 = vsel %vm587, %v585, 0
        %v592 = vsel %vm587, %v586, 0
        %594 = vmatpush.msra.mxu0 0.0
        %595 = vmatpush.msra.mxu0 0.0
        %596 = vmatpush.msra.mxu0 0.0
        %597 = vmatpush.msra.mxu0 0.0
        %598 = vmatpush.msra.mxu0 0.0
        %599 = vmatpush.msra.mxu0 0.0
        %600 = vmatpush.msra.mxu0 0.0
        %601 = vmatpush.msra.mxu0 0.0
        %602 = vmatpush.msra.mxu0 0.0
        %603 = vmatpush.msra.mxu0 0.0
        %604 = vmatpush.msra.mxu0 %v553
        %605 = vmatpush.msra.mxu0 %v552
        %606 = vmatpush.msra.mxu0 %v551
        %607 = vmatpush.msra.mxu0 %v550
        %608 = vmatpush.msra.mxu0 %v549
        %609 = vmatpush.msra.mxu0 %v548
        %610 = vmatmul.f32.gmra.mxu0 %v589
        %v611 = vpop.f32.mrf.mxu0
        %v612 = vadd.f32 0.0, %v611
        %613 = vmatmul.f32.gmra.mxu0 %v592
        %v614 = vpop.f32.mrf.mxu0
        %v615 = vadd.f32 0.0, %v614
        %616 = vdwg.mxu0
        %v618 = vperm.slane %v554, 0
        %v620 = vadd.f32 %v612, %v618
        %v621 = vadd.f32 %v615, %v618
        %vm622 = vcmp.gt.f32.partialorder %v620, 0.0
        %vm623 = vcmp.gt.f32.partialorder %v621, 0.0
        %v624 = vmul.f32 %v620, 0.01
        %v625 = vmul.f32 %v621, 0.01
        %v626 = vsel %vm622, %v620, %v624
        %v627 = vsel %vm623, %v621, %v625
        %628 = vst.msk [vmem:[#allocation4] sm:$0xff] %vm370, 0.0
        %629 = vst.msk [vmem:[#allocation4 + $0x18] sm:$0xff] %vm370, 0.0
        %v630 = vsel %vm422, %v626, 0.0
        %v631 = vsel %vm423, %v627, 0.0
        %634 = vrot.lane.b32.xlu0 %v630, 124
        %v635 = vpop.permute.xlu0 %634
        %636 = vrot.lane.b32.xlu0 %v631, 124
        %v637 = vpop.permute.xlu0 %636
        %640 = vst.msk [vmem:[#allocation4 + $0x8] sm:$0xff] %vm370, %v635
        %641 = vst.msk [vmem:[#allocation4 + $0x10] sm:$0xff] %vm370, %v637
        %v642 = vld [vmem:[#allocation4 + $0x6] sm:$0xff]
        %v643 = vld [vmem:[#allocation4 + $0xe] sm:$0xff]
        %v644 = vld [vmem:[#allocation4 + $0x7] sm:$0xff]
        %v645 = vld [vmem:[#allocation4 + $0xf] sm:$0xff]
        %v646 = vld [vmem:[#allocation4 + $0x8] sm:$0xff]
        %v647 = vld [vmem:[#allocation4 + $0x10] sm:$0xff]
        %v648 = vld [vmem:[#allocation4 + $0x9] sm:$0xff]
        %v649 = vld [vmem:[#allocation4 + $0x11] sm:$0xff]
        %v650 = vld [vmem:[#allocation4 + $0xa] sm:$0xff]
        %v651 = vld [vmem:[#allocation4 + $0x12] sm:$0xff]
        %654 = vrot.lane.b32.xlu0 %v644, 8
        %v655 = vpop.permute.xlu0 %654
        %656 = vrot.lane.b32.xlu0 %v645, 8
        %v657 = vpop.permute.xlu0 %656
        %662 = vrot.lane.b32.xlu0 %v646, 16
        %v663 = vpop.permute.xlu0 %662
        %664 = vrot.lane.b32.xlu0 %v647, 16
        %v665 = vpop.permute.xlu0 %664
        %670 = vrot.lane.b32.xlu0 %v648, 24
        %v671 = vpop.permute.xlu0 %670
        %672 = vrot.lane.b32.xlu0 %v649, 24
        %v673 = vpop.permute.xlu0 %672
        %678 = vrot.lane.b32.xlu0 %v650, 32
        %v679 = vpop.permute.xlu0 %678
        %680 = vrot.lane.b32.xlu0 %v651, 32
        %v681 = vpop.permute.xlu0 %680
        %v684 = vsel %vm370, %v642, %v655
        %v685 = vsel %vm370, %v643, %v657
        %v686 = vsel %vm480, %v684, %v663
        %v687 = vsel %vm480, %v685, %v665
        %v688 = vsel %vm483, %v686, %v671
        %v689 = vsel %vm483, %v687, %v673
        %v690 = vsel %vm486, %v688, %v679
        %v691 = vsel %vm486, %v689, %v681
        %v693 = vsel %vm489, %v690, 0
        %v696 = vsel %vm489, %v691, 0
        %698 = vmatpush.msra.mxu0 0.0
        %699 = vmatpush.msra.mxu0 0.0
        %700 = vmatpush.msra.mxu0 0.0
        %701 = vmatpush.msra.mxu0 0.0
        %702 = vmatpush.msra.mxu0 0.0
        %703 = vmatpush.msra.mxu0 0.0
        %704 = vmatpush.msra.mxu0 0.0
        %705 = vmatpush.msra.mxu0 0.0
        %706 = vmatpush.msra.mxu0 0.0
        %707 = vmatpush.msra.mxu0 0.0
        %708 = vmatpush.msra.mxu0 0.0
        %709 = vmatpush.msra.mxu0 %v559
        %710 = vmatpush.msra.mxu0 %v558
        %711 = vmatpush.msra.mxu0 %v557
        %712 = vmatpush.msra.mxu0 %v556
        %713 = vmatpush.msra.mxu0 %v555
        %714 = vmatmul.f32.gmra.mxu0 %v693
        %v715 = vpop.f32.mrf.mxu0
        %v716 = vadd.f32 0.0, %v715
        %717 = vmatmul.f32.gmra.mxu0 %v696
        %v718 = vpop.f32.mrf.mxu0
        %v719 = vadd.f32 0.0, %v718
        %720 = vdwg.mxu0
        %v722 = vperm.slane %v560, 0
        %v724 = vadd.f32 %v716, %v722
        %v725 = vadd.f32 %v719, %v722
        %728 = vrot.lane.b32.xlu0 %v724, 4
        %v729 = vpop.permute.xlu0 %728
        %730 = vrot.lane.b32.xlu0 %v725, 4
        %v731 = vpop.permute.xlu0 %730
        %v734 = vsel %vm367, %v620, %v729
        %v735 = vsel %vm367, %v621, %v731
        %v736 = vsel %vm373, %v734, %v620
        %v737 = vsel %vm373, %v735, %v621
        %vm738 = vcmp.gt.f32.partialorder %v736, 0.0
        %vm739 = vcmp.gt.f32.partialorder %v737, 0.0
        %v740 = vmul.f32 %v736, 0.01
        %v741 = vmul.f32 %v737, 0.01
        %v742 = vsel %vm738, %v736, %v740
        %v743 = vsel %vm739, %v737, %v741
        %744 = vst.msk [vmem:[%s325] sm:$0xff] %vm480, %v742
        %745 = vst.msk [vmem:[%s325 + $0x8] sm:$0xff] %vm480, %v743
        %s746 = sand.u32 %s225, 1
        %s747 = scalar_lea.sflag [#allocation6], %s746
        %s748 = sand.u32 %s225, 1
        %s749 = smul.addr %s748, 16
        %s750 = scalar_lea.vmem [#allocation5], %s749
        // Predicated region
        $region57: #{tpu_custom_call.1} parent=55 // pred_check
          %p751 = pneg %p235
        $region58: #{tpu_custom_call.1} parent=55 // pred_check_branch
          %753 = sbr.rel (%p751) target = $region60
        $region59: #{tpu_custom_call.1} parent=55 // pred_region
          %755 = vsyncadd %s747, 0
          %s756 = smul.addr %s23, 2
          %s757 = smul.addr %s756, 8
          %s758 = scalar_lea.hbm %s9, %s757
          %s759 = sshll.u32 %s750, 4
          %s760 = int_to_ptr.vmem [resolvable:$true] %s759
          %s761 = sshll.u32 %s758, 4
          %s762 = int_to_ptr.hbm [resolvable:$true] %s761
          %767 = dma.vmem_to_hbm [thread:$0]  %s760, 256, %s762, %s747, 128, 128, 8
        $region60: #{tpu_custom_call.1} parent=55 // pred_fallthru
          _
      $region56: #{tpu_custom_call.1} parent=5 // pred_fallthru
        _
      %p768 = scmp.le.s32.totalorder 2, %s18
      // Predicated region
      $region61: #{tpu_custom_call.1} parent=5 // pred_check
        %p769 = pneg %p768
      $region62: #{tpu_custom_call.1} parent=5 // pred_check_branch
        %771 = sbr.rel (%p769) target = $region64
      $region63: #{tpu_custom_call.1} parent=5 // pred_region
        %s772 = ssub.s32 %s18, 2
        // Predicated region
        $region65: #{tpu_custom_call.1} parent=63 // pred_check
          %p773 = pneg %p241
        $region66: #{tpu_custom_call.1} parent=63 // pred_check_branch
          %775 = sbr.rel (%p773) target = $region68
        $region67: #{tpu_custom_call.1} parent=63 // pred_region
          %s776 = sand.u32 %s226, 1
          %s777 = scalar_lea.sflag [#allocation6], %s776
          %s778 = sand.u32 %s226, 1
          %s779 = smul.addr %s778, 16
          %s780 = scalar_lea.vmem [#allocation5], %s779
          %782 = dma.done %s777, 256
        $region68: #{tpu_custom_call.1} parent=63 // pred_fallthru
          _
      $region64: #{tpu_custom_call.1} parent=5 // pred_fallthru
        _
    $region6: #{tpu_custom_call.1} parent=1 // loop_footer
      %s22 = sadd.s32 1, %s18
    $region7: #{tpu_custom_call.1} parent=1 // loop_footer_branch
      %17 = sbr.rel target = $region3
    $region8: #{tpu_custom_call.1} parent=1 // loop_exit
      _
    %783 = vsyncpa [#allocation6], 1
    %s784 = scalar_lea.sflag [#allocation6], 1
    %785 = vsyncpa %s784, 1

</llo_original>
